<compile_context>
chip_gen: v6e
topology: v6e:2x2x1
jax: 0.10.0
libtpu: 0.0.40
codegen_flags: <defaults>
</compile_context>

<pallas_src>
import jax
import jax.numpy as jnp
from jax import lax
from jax.experimental import pallas as pl
from jax.experimental.pallas import tpu as pltpu


# x[M, K] . w[N, K] -> [M, N]  (rhs contracted on its last dim; no W transpose)
_DOT_DIMS = (((1,), (1,)), ((), ()))


def _round_up(x, m):
    return ((x + m - 1) // m) * m


def _cdiv(a, b):
    return -(-a // b)


# ----------------------------- kernel bodies --------------------------------

def _zerofc_kernel_single_k(x_ref, w_ref, e_ref, b_ref, o_ref):
    # Whole contraction in one grid step: matmul -> scale -> bias -> store.
    acc = lax.dot_general(x_ref[...], w_ref[...], _DOT_DIMS,
                          preferred_element_type=jnp.float32)
    o_ref[...] = (acc * e_ref[...] + b_ref[...]).astype(o_ref.dtype)


def _zerofc_kernel_multi_k_f32(x_ref, w_ref, e_ref, b_ref, o_ref):
    # f32 output: accumulate directly into the VMEM-resident output block
    # (its index_map ignores k), no scratch accumulator needed.
    k = pl.program_id(2)
    prod = lax.dot_general(x_ref[...], w_ref[...], _DOT_DIMS,
                           preferred_element_type=jnp.float32)

    @pl.when(k == 0)
    def _():
        o_ref[...] = prod

    @pl.when(k != 0)
    def _():
        o_ref[...] += prod

    @pl.when(k == pl.num_programs(2) - 1)
    def _():
        o_ref[...] = o_ref[...] * e_ref[...] + b_ref[...]


def _zerofc_kernel_multi_k_acc(x_ref, w_ref, e_ref, b_ref, o_ref, acc_ref):
    # Generic (non-f32) output dtype: f32 scratch accumulator, cast at the end.
    k = pl.program_id(2)
    prod = lax.dot_general(x_ref[...], w_ref[...], _DOT_DIMS,
                           preferred_element_type=jnp.float32)

    @pl.when(k == 0)
    def _():
        acc_ref[...] = prod

    @pl.when(k != 0)
    def _():
        acc_ref[...] += prod

    @pl.when(k == pl.num_programs(2) - 1)
    def _():
        o_ref[...] = (acc_ref[...] * e_ref[...] + b_ref[...]).astype(o_ref.dtype)


# ------------------------------- wrapper -------------------------------------

def zero_fc(x, weight, bias, scale, *, bm=None, bn=None, bk=None,
            compute_dtype=jnp.bfloat16):
    """Pallas implementation of ZeroFC.forward.

    x:      [B, in_dim]
    weight: [out_dim, in_dim]   (torch.nn.Linear layout, NOT transposed)
    bias:   [out_dim]
    scale:  [out_dim]
    returns [B, out_dim] in x.dtype.
    """
    B, in_dim = x.shape
    out_dim, in_dim_w = weight.shape
    assert in_dim_w == in_dim
    out_dtype = x.dtype

    # --- chip-aware VMEM budget & tile caps ---------------------------------
    try:
        vmem_cap = int(pltpu.get_tpu_info().vmem_capacity_bytes)
    except Exception:
        vmem_cap = 64 * 1024 * 1024
    if vmem_cap <= 0:
        vmem_cap = 64 * 1024 * 1024
    vmem_limit = min(int(vmem_cap * 0.75), 100 * 1024 * 1024)
    max_tile = 1024 if vmem_cap >= (96 << 20) else 512   # v5e/v6e vs v7x

    # --- tile sizes ----------------------------------------------------------
    bm_user, bn_user = bm, bn
    if bm is None:
        bm = min(max_tile, _round_up(B, 16))       # 16-row align for bf16 packing

    # N: pad (only when needed) to a multiple of 128 for unmasked lane-dense vst.
    N_pad = _round_up(out_dim, 128)
    if bn is None:
        for cand in (1024, 512, 256, 128):
            if cand <= max_tile and N_pad % cand == 0:
                bn = cand
                break
    else:
        N_pad = _round_up(N_pad, bn)

    # K: one full block (no padding, no reduction loop) when it fits easily in
    # VMEM; otherwise 512-wide reduction steps with exact zero padding.
    if bk is None:
        bk = in_dim if in_dim <= 2048 else 512
    K_pad = _round_up(in_dim, bk)

    grid_m = _cdiv(B, bm)
    grid_n = N_pad // bn
    grid_k = K_pad // bk

    # v7x has 2 TensorCores: ensure >= 2 parallel output tiles when possible.
    if grid_m * grid_n == 1 and bm_user is None and bn_user is None:
        if bn >= 256:
            bn //= 2
            grid_n = N_pad // bn
        elif B > 16:
            bm = _round_up(_cdiv(B, 2), 16)
            grid_m = _cdiv(B, bm)

    # --- operand preparation (no full-weight transpose / scale rewrite) ------
    xc = x if x.dtype == compute_dtype else x.astype(compute_dtype)
    wc = weight if weight.dtype == compute_dtype else weight.astype(compute_dtype)

    exp_scale = jnp.exp(scale.astype(jnp.float32) * 3.0)          # [out_dim]
    b_eff = bias.astype(jnp.float32) * exp_scale                  # [out_dim]

    pad_k = K_pad - in_dim
    pad_n = N_pad - out_dim
    if pad_k:
        xc = jnp.pad(xc, ((0, 0), (0, pad_k)))                    # zeros: exact
    if pad_k or pad_n:
        wc = jnp.pad(wc, ((0, pad_n), (0, pad_k)))
    if pad_n:
        exp_scale = jnp.pad(exp_scale, (0, pad_n))
        b_eff = jnp.pad(b_eff, (0, pad_n))
    e2 = exp_scale.reshape(1, N_pad)
    b2 = b_eff.reshape(1, N_pad)

    # --- specs ----------------------------------------------------------------
    x_spec = pl.BlockSpec((bm, bk), lambda i, j, k: (i, k))
    w_index = lambda i, j, k: (j, k)
    if bm <= 64 and grid_n * grid_k >= 3:
        # Small-batch: weight-DMA bound; deepen the weight stream pipeline.
        w_spec = pl.BlockSpec((bn, bk), w_index, pipeline_mode=pl.Buffered(3))
    else:
        w_spec = pl.BlockSpec((bn, bk), w_index)
    e_spec = pl.BlockSpec((1, bn), lambda i, j, k: (0, j))
    b_spec = pl.BlockSpec((1, bn), lambda i, j, k: (0, j))
    o_spec = pl.BlockSpec((bm, bn), lambda i, j, k: (i, j))

    if grid_k == 1:
        kernel = _zerofc_kernel_single_k
        scratch = []
    elif out_dtype == jnp.float32:
        kernel = _zerofc_kernel_multi_k_f32
        scratch = []
    else:
        kernel = _zerofc_kernel_multi_k_acc
        scratch = [pltpu.VMEM((bm, bn), jnp.float32)]

    out_p = pl.pallas_call(
        kernel,
        out_shape=jax.ShapeDtypeStruct((B, N_pad), out_dtype),
        grid_spec=pltpu.PrefetchScalarGridSpec(
            num_scalar_prefetch=0,
            grid=(grid_m, grid_n, grid_k),
            in_specs=[x_spec, w_spec, e_spec, b_spec],
            out_specs=o_spec,
            scratch_shapes=scratch,
        ),
        compiler_params=pltpu.CompilerParams(
            dimension_semantics=("parallel", "parallel", "arbitrary"),
            vmem_limit_bytes=vmem_limit,
        ),
    )(xc, wc, e2, b2)

    return out_p if pad_n == 0 else out_p[:, :out_dim]


# ------------------------------ self-test ------------------------------------

def _ref_f32(x, w, b, s):
    y = jnp.matmul(x, w.T, precision=lax.Precision.HIGHEST) + b
    return y * jnp.exp(3.0 * s)


def _ref_bf16(x, w, b, s):
    xb = x.astype(jnp.bfloat16).astype(jnp.float32)
    wb = w.astype(jnp.bfloat16).astype(jnp.float32)
    y = jnp.matmul(xb, wb.T, precision=lax.Precision.HIGHEST) + b
    return y * jnp.exp(3.0 * s)


if __name__ == "__main__":
    key = jax.random.PRNGKey(0)
    k = jax.random.split(key, 12)

    # ---- Test 1: small shapes matching the module's forward -----------------
    B, in_dim, out_dim = 16, 32, 64
    x = jax.random.normal(k[0], (B, in_dim), dtype=jnp.float32)
    w = 0.1 * jax.random.normal(k[1], (out_dim, in_dim), dtype=jnp.float32)
    b = 0.1 * jax.random.normal(k[2], (out_dim,), dtype=jnp.float32)
    s = 0.1 * jax.random.normal(k[3], (out_dim,), dtype=jnp.float32)

    out = jax.block_until_ready(zero_fc(x, w, b, s))
    assert out.shape == (B, out_dim)
    assert jnp.allclose(out, _ref_bf16(x, w, b, s), atol=1e-4, rtol=1e-4), \
        "mismatch vs bf16-rounded reference"
    assert jnp.allclose(out, _ref_f32(x, w, b, s), atol=3e-2, rtol=3e-2), \
        "mismatch vs f32 reference"

    # Zero-init case (matches ZeroFC.__init__): output must be exactly zero.
    zeros_out = jax.block_until_ready(
        zero_fc(x,
                jnp.zeros((out_dim, in_dim), jnp.float32),
                jnp.zeros((out_dim,), jnp.float32),
                jnp.zeros((out_dim,), jnp.float32)))
    assert jnp.allclose(zeros_out, 0.0)

    # ---- Test 2: ragged batch + non-128 out_dim (masked M, padded N) --------
    B2, K2, N2 = 200, 160, 200
    x2 = jax.random.normal(k[4], (B2, K2), dtype=jnp.float32)
    w2 = 0.05 * jax.random.normal(k[5], (N2, K2), dtype=jnp.float32)
    b2 = 0.05 * jax.random.normal(k[6], (N2,), dtype=jnp.float32)
    s2 = 0.05 * jax.random.normal(k[7], (N2,), dtype=jnp.float32)
    out2 = jax.block_until_ready(zero_fc(x2, w2, b2, s2, bm=128))
    assert out2.shape == (B2, N2)
    assert jnp.allclose(out2, _ref_bf16(x2, w2, b2, s2), atol=1e-3, rtol=1e-3), \
        "ragged-M mismatch vs bf16-rounded reference"
    assert jnp.allclose(out2, _ref_f32(x2, w2, b2, s2), atol=3e-2, rtol=3e-2), \
        "ragged-M mismatch vs f32 reference"

    # ---- Test 3: large in_dim -> multi-step K reduction with K zero-padding --
    B3, K3, N3 = 128, 2304, 384
    x3 = jax.random.normal(k[8], (B3, K3), dtype=jnp.float32)
    w3 = 0.02 * jax.random.normal(k[9], (N3, K3), dtype=jnp.float32)
    b3 = 0.02 * jax.random.normal(k[10], (N3,), dtype=jnp.float32)
    s3 = 0.02 * jax.random.normal(k[11], (N3,), dtype=jnp.float32)
    out3 = jax.block_until_ready(zero_fc(x3, w3, b3, s3))
    assert out3.shape == (B3, N3)
    assert jnp.allclose(out3, _ref_bf16(x3, w3, b3, s3), atol=1e-3, rtol=1e-3), \
        "multi-K mismatch vs bf16-rounded reference"
    assert jnp.allclose(out3, _ref_f32(x3, w3, b3, s3), atol=5e-2, rtol=5e-2), \
        "multi-K mismatch vs f32 reference"

    print("KERNEL_OK")
</pallas_src>

<mosaic_0001>
module attributes {stable_mosaic.version = 11 : i64} {
  func.func @_zerofc_kernel_single_k(%arg0: i32, %arg1: i32, %arg2: i32, %arg3: memref<16x32xbf16, #tpu.memory_space<vmem>>, %arg4: memref<128x32xbf16, #tpu.memory_space<vmem>>, %arg5: memref<1x128xf32, #tpu.memory_space<vmem>>, %arg6: memref<1x128xf32, #tpu.memory_space<vmem>>, %arg7: memref<16x128xf32, #tpu.memory_space<vmem>>) attributes {dimension_semantics = [#tpu.dimension_semantics<parallel>, #tpu.dimension_semantics<parallel>, #tpu.dimension_semantics<arbitrary>], iteration_bounds = array<i64: 1, 1, 1>, scalar_prefetch = 0 : i64, scratch_operands = 0 : i64, tpu.core_type = #tpu.core_type<tc>, window_params = [{transform_indices = @transform_0, window_bounds = array<i64: 16, 32>}, {transform_indices = @transform_1, window_bounds = array<i64: 128, 32>}, {transform_indices = @transform_2, window_bounds = array<i64: 1, 128>}, {transform_indices = @transform_3, window_bounds = array<i64: 1, 128>}, {transform_indices = @transform_4, window_bounds = array<i64: 16, 128>}]} {
    %c0 = arith.constant 0 : index
    %c0_0 = arith.constant 0 : index
    %0 = vector.load %arg3[%c0, %c0_0] : memref<16x32xbf16, #tpu.memory_space<vmem>>, vector<16x32xbf16>
    %c0_1 = arith.constant 0 : index
    %c0_2 = arith.constant 0 : index
    %1 = vector.load %arg4[%c0_1, %c0_2] : memref<128x32xbf16, #tpu.memory_space<vmem>>, vector<128x32xbf16>
    %cst = arith.constant dense<0.000000e+00> : vector<16x128xf32>
    %2 = tpu.matmul %0, %1, %cst {dimension_numbers = #tpu.dot_dimension_numbers<[1], [1], [0], [0], [0, 0, 1, 0], [], []>} : vector<16x32xbf16>, vector<128x32xbf16>, vector<16x128xf32> -> vector<16x128xf32>
    %c0_3 = arith.constant 0 : index
    %c0_4 = arith.constant 0 : index
    %3 = vector.load %arg5[%c0_3, %c0_4] : memref<1x128xf32, #tpu.memory_space<vmem>>, vector<1x128xf32>
    %4 = vector.broadcast %3 : vector<1x128xf32> to vector<16x128xf32>
    %5 = arith.mulf %2, %4 : vector<16x128xf32>
    %c0_5 = arith.constant 0 : index
    %c0_6 = arith.constant 0 : index
    %6 = vector.load %arg6[%c0_5, %c0_6] : memref<1x128xf32, #tpu.memory_space<vmem>>, vector<1x128xf32>
    %7 = vector.broadcast %6 : vector<1x128xf32> to vector<16x128xf32>
    %8 = arith.addf %5, %7 : vector<16x128xf32>
    %c0_7 = arith.constant 0 : index
    %c0_8 = arith.constant 0 : index
    %9 = vector.load %arg7[%c0_7, %c0_8] : memref<16x128xf32, #tpu.memory_space<vmem>>, vector<16x128xf32>
    tpu.vector_store %arg7[%c0_7, %c0_8], %8 {strides = array<i32>} : memref<16x128xf32, #tpu.memory_space<vmem>>, vector<16x128xf32>,
    return
  }
  func.func @transform_0(%arg0: i32, %arg1: i32, %arg2: i32) -> (i32, i32) {
    %c0_i32 = arith.constant 0 : i32
    return %arg0, %arg2 : i32, i32
  }
  func.func @transform_1(%arg0: i32, %arg1: i32, %arg2: i32) -> (i32, i32) {
    %c0_i32 = arith.constant 0 : i32
    return %arg1, %arg2 : i32, i32
  }
  func.func @transform_2(%arg0: i32, %arg1: i32, %arg2: i32) -> (i32, i32) {
    %c0_i32 = arith.constant 0 : i32
    %c0_i32_0 = arith.constant 0 : i32
    return %c0_i32, %arg1 : i32, i32
  }
  func.func @transform_3(%arg0: i32, %arg1: i32, %arg2: i32) -> (i32, i32) {
    %c0_i32 = arith.constant 0 : i32
    %c0_i32_0 = arith.constant 0 : i32
    return %c0_i32, %arg1 : i32, i32
  }
  func.func @transform_4(%arg0: i32, %arg1: i32, %arg2: i32) -> (i32, i32) {
    %c0_i32 = arith.constant 0 : i32
    return %arg0, %arg1 : i32, i32
  }
}

</mosaic_0001>

<llo_original>
// kernel: tpu_custom_call.1
$region0: #{tpu_custom_call.1}
  #allocation0 [shape = 'u32[]', space=smem, size = 0x4, offset = 0x4, fixed_abs, tag = 'smem constant byte address 0x4 - core index']
  #allocation1 [shape = 'u32[144,128]{1,0:T(1,128)}', space=vmem, size = 0x12000, scoped, tag = 'internal scratch']
  %s0 = inlined_call_operand.vmem [shape: bf16[16,32], index: 0, kind: input, shape index: {}]
  %s1 = inlined_call_operand.vmem [shape: bf16[128,32], index: 1, kind: input, shape index: {}]
  %s2 = inlined_call_operand.vmem [shape: f32[1,128], index: 2, kind: input, shape index: {}]
  %s3 = inlined_call_operand.vmem [shape: f32[1,128], index: 3, kind: input, shape index: {}]
  %s4 = inlined_call_operand.hbm [shape: f32[16,128], index: 4, kind: output, shape index: {}]
  %s5 = sld [smem:[#allocation0]]
  $region26: #{tpu_custom_call.1} parent=0
    _
  %s7 = ssub.s32 1, %s5
  %s8 = scalar_select 0, %s7, %s5
  $region1: #{tpu_custom_call.1} parent=0
    #allocation2 [shape = 'u8[8192]{0}', space=vmem, size = 0x2000, scoped, tag = 'output window, operand 0, single buffered']
    #allocation3 [shape = 's32[1]{0}', space=sflag, size = 0x4, scoped, tag = 'scoped memory for tpu_custom_call.1']
    %9 = vsyncpa [#allocation3], 0
    // Predicated region
    $region2: #{tpu_custom_call.1} parent=1 // pred_check
      _
    $region3: #{tpu_custom_call.1} parent=1 // pred_check_branch
      %11 = sbr.rel (0) target = $region5
    $region4: #{tpu_custom_call.1} parent=1 // pred_region
      _
    $region5: #{tpu_custom_call.1} parent=1 // pred_fallthru
      _
    // Predicated region
    $region6: #{tpu_custom_call.1} parent=1 // pred_check
      _
    $region7: #{tpu_custom_call.1} parent=1 // pred_check_branch
      %13 = sbr.rel (0) target = $region9
    $region8: #{tpu_custom_call.1} parent=1 // pred_region
      _
    $region9: #{tpu_custom_call.1} parent=1 // pred_fallthru
      _
    // Predicated region
    $region10: #{tpu_custom_call.1} parent=1 // pred_check
      _
    $region11: #{tpu_custom_call.1} parent=1 // pred_check_branch
      %15 = sbr.rel (0) target = $region13
    $region12: #{tpu_custom_call.1} parent=1 // pred_region
      _
    $region13: #{tpu_custom_call.1} parent=1 // pred_fallthru
      _
    // Predicated region
    $region14: #{tpu_custom_call.1} parent=1 // pred_check
      _
    $region15: #{tpu_custom_call.1} parent=1 // pred_check_branch
      %17 = sbr.rel (0) target = $region17
    $region16: #{tpu_custom_call.1} parent=1 // pred_region
      _
    $region17: #{tpu_custom_call.1} parent=1 // pred_fallthru
      _
    %v19 = vld [vmem:[%s0] sm:$0xf]
    %v20 = vld [vmem:[%s0 + $0x4] sm:$0xf]
    %v21 = vld [vmem:[%s1] sm:$0xf]
    %v22 = vld [vmem:[%s1 + $0x4] sm:$0xf]
    %v23 = vld [vmem:[%s1 + $0x8] sm:$0xf]
    %v24 = vld [vmem:[%s1 + $0xc] sm:$0xf]
    %v25 = vld [vmem:[%s1 + $0x10] sm:$0xf]
    %v26 = vld [vmem:[%s1 + $0x14] sm:$0xf]
    %v27 = vld [vmem:[%s1 + $0x18] sm:$0xf]
    %v28 = vld [vmem:[%s1 + $0x1c] sm:$0xf]
    %v29 = vld [vmem:[%s1 + $0x20] sm:$0xf]
    %v30 = vld [vmem:[%s1 + $0x24] sm:$0xf]
    %v31 = vld [vmem:[%s1 + $0x28] sm:$0xf]
    %v32 = vld [vmem:[%s1 + $0x2c] sm:$0xf]
    %v33 = vld [vmem:[%s1 + $0x30] sm:$0xf]
    %v34 = vld [vmem:[%s1 + $0x34] sm:$0xf]
    %v35 = vld [vmem:[%s1 + $0x38] sm:$0xf]
    %v36 = vld [vmem:[%s1 + $0x3c] sm:$0xf]
    %v39 = vunpack.c.l.b16 %v19
    %v40 = vunpack.c.l.b16 %v20
    %v41 = vpack.c.b16 %v40, %v39
    %v58 = vunpack.c.l.b16 %v21
    %v59 = vunpack.c.l.b16 %v22
    %v60 = vunpack.c.l.b16 %v23
    %v61 = vunpack.c.l.b16 %v24
    %v62 = vunpack.c.l.b16 %v25
    %v63 = vunpack.c.l.b16 %v26
    %v64 = vunpack.c.l.b16 %v27
    %v65 = vunpack.c.l.b16 %v28
    %v66 = vunpack.c.l.b16 %v29
    %v67 = vunpack.c.l.b16 %v30
    %v68 = vunpack.c.l.b16 %v31
    %v69 = vunpack.c.l.b16 %v32
    %v70 = vunpack.c.l.b16 %v33
    %v71 = vunpack.c.l.b16 %v34
    %v72 = vunpack.c.l.b16 %v35
    %v73 = vunpack.c.l.b16 %v36
    %v74 = vpack.c.b16 %v59, %v58
    %v75 = vpack.c.b16 %v61, %v60
    %v76 = vpack.c.b16 %v63, %v62
    %v77 = vpack.c.b16 %v65, %v64
    %v78 = vpack.c.b16 %v67, %v66
    %v79 = vpack.c.b16 %v69, %v68
    %v80 = vpack.c.b16 %v71, %v70
    %v81 = vpack.c.b16 %v73, %v72
    %vm82 = vcmask 261120
    %v84 = vsel %vm82, %v41, 0
    %v87 = vsel %vm82, %v74, 0
    %v90 = vsel %vm82, %v75, 0
    %v93 = vsel %vm82, %v76, 0
    %v96 = vsel %vm82, %v77, 0
    %v99 = vsel %vm82, %v78, 0
    %v102 = vsel %vm82, %v79, 0
    %v105 = vsel %vm82, %v80, 0
    %v108 = vsel %vm82, %v81, 0
    %110 = vmatprep.subr.bf16.mxu0 0
    %111 = vmatpush1.bf16.xpose.msra.mxu0 %v108
    %112 = vmatprep.subr.bf16.mxu0 0
    %113 = vmatpush1.bf16.xpose.msra.mxu0 %v105
    %114 = vmatprep.subr.bf16.mxu0 0
    %115 = vmatpush1.bf16.xpose.msra.mxu0 %v102
    %116 = vmatprep.subr.bf16.mxu0 0
    %117 = vmatpush1.bf16.xpose.msra.mxu0 %v99
    %118 = vmatprep.subr.bf16.mxu0 0
    %119 = vmatpush1.bf16.xpose.msra.mxu0 %v96
    %120 = vmatprep.subr.bf16.mxu0 0
    %121 = vmatpush1.bf16.xpose.msra.mxu0 %v93
    %122 = vmatprep.subr.bf16.mxu0 0
    %123 = vmatpush1.bf16.xpose.msra.mxu0 %v90
    %124 = vmatprep.subr.bf16.mxu0 0
    %125 = vmatpush1.bf16.xpose.msra.mxu0 %v87
    %126 = vmatprep.subr.bf16.mxu0 0
    %127 = vmatpush2.bf16.xpose.msra.mxu0 0
    %128 = vmatprep.subr.bf16.mxu0 0
    %129 = vmatpush2.bf16.xpose.msra.mxu0 0
    %130 = vmatprep.subr.bf16.mxu0 0
    %131 = vmatpush2.bf16.xpose.msra.mxu0 0
    %132 = vmatprep.subr.bf16.mxu0 0
    %133 = vmatpush2.bf16.xpose.msra.mxu0 0
    %134 = vmatprep.subr.bf16.mxu0 0
    %135 = vmatpush2.bf16.xpose.msra.mxu0 0
    %136 = vmatprep.subr.bf16.mxu0 0
    %137 = vmatpush2.bf16.xpose.msra.mxu0 0
    %138 = vmatprep.subr.bf16.mxu0 0
    %139 = vmatpush2.bf16.xpose.msra.mxu0 0
    %140 = vmatprep.subr.bf16.mxu0 0
    %141 = vmatpush2.bf16.xpose.msra.mxu0 0
    %142 = vmatprep.mubr.bf16.mxu0 0
    %143 = vmatmul.mubr.bf16.gmra.mxu0 %v84
    %v144 = vpop.f32.mrf.mxu0
    %v145 = vadd.f32 0.0, %v144
    %v146 = vpop.f32.mrf.mxu0
    %v147 = vpop.f32.mrf.mxu0
    %v148 = vadd.f32 0.0, %v147
    %v149 = vpop.f32.mrf.mxu0
    %150 = vdwg.mxu0
    %v151 = vld [vmem:[%s2] sm:$0x1]
    %v153 = vlaneseq
    %v154 = vshrl.u32 %v153, 7
    %v155 = vsub.s32 0, %v154
    %v156 = vrot.slane %v151, %v155
    %v158 = vmul.f32 %v145, %v156
    %v159 = vmul.f32 %v148, %v156
    %v160 = vld [vmem:[%s3] sm:$0x1]
    %v162 = vlaneseq
    %v163 = vshrl.u32 %v162, 7
    %v164 = vsub.s32 0, %v163
    %v165 = vrot.slane %v160, %v164
    %v167 = vadd.f32 %v158, %v165
    %v168 = vadd.f32 %v159, %v165
    %169 = vst [vmem:[#allocation2] sm:$0xff] %v167
    %170 = vst [vmem:[#allocation2 + $0x8] sm:$0xff] %v168
    // Predicated region
    $region18: #{tpu_custom_call.1} parent=1 // pred_check
      _
    $region19: #{tpu_custom_call.1} parent=1 // pred_check_branch
      %172 = sbr.rel (0) target = $region21
    $region20: #{tpu_custom_call.1} parent=1 // pred_region
      %s174 = ssub.s32 256, 256
      %175 = vsyncadd [#allocation3], %s174
      %s176 = sshll.u32 [#allocation2], 4
      %s177 = int_to_ptr.vmem [resolvable:$true] %s176
      %182 = dma.vmem_to_hbm [thread:$0]  %s177, 256, %s4, [#allocation3], 128, 128, 8
    $region21: #{tpu_custom_call.1} parent=1 // pred_fallthru
      _
    // Predicated region
    $region22: #{tpu_custom_call.1} parent=1 // pred_check
      _
    $region23: #{tpu_custom_call.1} parent=1 // pred_check_branch
      %184 = sbr.rel (0) target = $region25
    $region24: #{tpu_custom_call.1} parent=1 // pred_region
      %185 = dma.done [#allocation3], 256
    $region25: #{tpu_custom_call.1} parent=1 // pred_fallthru
      _
    %186 = vsyncpa [#allocation3], 1

</llo_original>
